<compile_context>
chip_gen: v7x
topology: tpu7x:2x2x1
jax: 0.10.0
libtpu: 0.0.40
codegen_flags: <defaults>
</compile_context>

<pallas_src>
import functools

import jax
import jax.numpy as jnp
import numpy as np
from jax.experimental import pallas as pl
from jax.experimental.pallas import tpu as pltpu


def _round_up(x, m):
    return ((x + m - 1) // m) * m


def _vmem_limit_bytes():
    cap = 128 * 1024 * 1024
    try:
        info = pltpu.get_tpu_info()
        cap = int(getattr(info, "vmem_capacity_bytes", cap))
    except Exception:
        pass
    return max(32 * 1024 * 1024, min(cap * 3 // 4, 100 * 1024 * 1024))


# ----------------------------------------------------------------------------
# Fused per-branch kernel (one pallas_call per branch; shapes/taps specialized).
#   xe_ref   : (CIp, LX)   bf16 zero-padded input canvas (channels x flat pos)
#   mask_ref : (1,  L1)    f32, 1.0 at valid interior positions, 0.0 elsewhere
#   w1_ref   : (CC, T*CIp) bf16 folded conv1 weights
#   w2_ref   : (CC, T*CC)  bf16 folded conv2 weights
#   g/beta   : (CC, 1)     f32 BN affine params
#   out_ref  : (CC, Qp)    f32 lane-dense branch output (padded canvas layout)
#   scratch  : multi-tap: cols1(T*CIp,L1) bf16, y1(CC,L1) f32, h1(CC,L1) bf16,
#                          cols2(T*CC,Qp) bf16
#              single-tap: y1(CC,L1) f32, h1(CC,L1) bf16
# ----------------------------------------------------------------------------
def _branch_kernel(xe_ref, mask_ref, w1_ref, w2_ref, g1_ref, be1_ref,
                   g2_ref, be2_ref, out_ref, *scratch,
                   shifts, cin_p, cc_p, x_off, h_off, q_len, l1_len,
                   count, eps):
    multi_tap = len(shifts) > 1
    if multi_tap:
        cols1_ref, y1_ref, h1_ref, cols2_ref = scratch
    else:
        y1_ref, h1_ref = scratch

    inv_count = 1.0 / float(count)
    m1 = mask_ref[...]                                       # (1, L1)

    # ---- conv1: per-branch tap gather (no zero taps) + one folded MXU dot ---
    if multi_tap:
        for t, s in enumerate(shifts):
            start = x_off + s                                # static python int
            cols1_ref[t * cin_p:(t + 1) * cin_p, :] = xe_ref[:, start:start + l1_len]
        lhs1 = cols1_ref[...]
    else:
        start = x_off + shifts[0]
        lhs1 = xe_ref[:, start:start + l1_len]
    y1_ref[...] = jnp.dot(w1_ref[...], lhs1,                 # bf16 x bf16 -> f32
                          preferred_element_type=jnp.float32)

    # ---- BN1: one-pass masked sum / sum-of-squares, then fused FMA+ReLU -----
    y1 = y1_ref[...]
    ym = y1 * m1
    mean1 = jnp.sum(ym, axis=1, keepdims=True) * inv_count
    var1 = jnp.maximum(jnp.sum(ym * ym, axis=1, keepdims=True) * inv_count
                       - mean1 * mean1, 0.0)
    scale1 = g1_ref[...] * jax.lax.rsqrt(var1 + eps)
    bias1 = be1_ref[...] - mean1 * scale1
    # masked halo -> zeros == conv2's zero padding; bf16 operand for 2nd dot
    h1_ref[...] = (jnp.maximum(y1 * scale1 + bias1, 0.0) * m1).astype(jnp.bfloat16)

    # ---- conv2: gather from the VMEM-resident intermediate (no HBM trip) ----
    if multi_tap:
        for t, s in enumerate(shifts):
            start = h_off + s
            cols2_ref[t * cc_p:(t + 1) * cc_p, :] = h1_ref[:, start:start + q_len]
        rhs2 = cols2_ref[...]
    else:
        start = h_off + shifts[0]
        rhs2 = h1_ref[:, start:start + q_len]
    out_ref[...] = jnp.dot(w2_ref[...], rhs2,
                           preferred_element_type=jnp.float32)

    # ---- BN2 + ReLU applied in place on the resident output block -----------
    m2 = mask_ref[:, h_off:h_off + q_len]                    # (1, Qp)
    y2 = out_ref[...]
    ym2 = y2 * m2
    mean2 = jnp.sum(ym2, axis=1, keepdims=True) * inv_count
    var2 = jnp.maximum(jnp.sum(ym2 * ym2, axis=1, keepdims=True) * inv_count
                       - mean2 * mean2, 0.0)
    scale2 = g2_ref[...] * jax.lax.rsqrt(var2 + eps)
    bias2 = be2_ref[...] - mean2 * scale2
    # padded-ring / lane-tail positions hold ReLU(bias2); the wrapper strips them.
    out_ref[...] = jnp.maximum(y2 * scale2 + bias2, 0.0)


# ----------------------------------------------------------------------------
# Wrapper glue: one-time padding / weight folding (layout plumbing) + pallas_call
# ----------------------------------------------------------------------------
def _fold_weight(w, k, cin, cin_p, cout, cout_p):
    """(k*k, cin, cout) f32 -> (cout_p, k*k*cin_p) bf16; col = tap*cin_p + cin."""
    T = k * k
    wf = jnp.zeros((T, cin_p, cout_p), jnp.float32)
    wf = wf.at[:, :cin, :cout].set(w.reshape(T, cin, cout))
    return wf.transpose(2, 0, 1).reshape(cout_p, T * cin_p).astype(jnp.bfloat16)


def _pad_bn(v, cc_p):
    return jnp.pad(v.astype(jnp.float32), (0, cc_p - v.shape[0])).reshape(cc_p, 1)


def block_forward(x, branch_params, dilation, *, eps=1e-5):
    """Equivalent of Block.forward.  x: (N,H,W,Cin) NHWC -> (N,H,W,conv) NHWC."""
    N, H, W, Cin = x.shape
    Cconv = branch_params[0]["w2"].shape[-1]
    for p in branch_params:
        assert p["k"] % 2 == 1, "odd kernel sizes required ('same' convolution)"
    kmax = max(p["k"] for p in branch_params)

    pad = dilation * ((kmax - 1) // 2)          # common canvas halo (max branch)
    Hp, Wp = H + 2 * pad, W + 2 * pad
    Q = N * Hp * Wp                             # padded-canvas positions
    Qp = _round_up(Q, 128)                      # lane-dense output length
    M_max = pad * Wp + pad                      # max |flat tap shift| (any branch)
    m1off_max = _round_up(M_max, 128) if M_max else 0
    x_base = _round_up(m1off_max + M_max, 128) if M_max else 0
    LX = x_base + Qp + 2 * m1off_max            # input canvas length (128-mult)

    CIp = _round_up(Cin, 16)                    # bf16 sublane-tile aligned
    CC = _round_up(Cconv, 16)
    count = N * H * W                           # BN statistics population

    # Zero-padded, channel-major, lane-flattened input canvas (built once, bf16).
    xt = jnp.transpose(x, (3, 0, 1, 2)).astype(jnp.float32)          # (Cin,N,H,W)
    xt = jnp.pad(xt, ((0, CIp - Cin), (0, 0), (pad, pad), (pad, pad)))
    xe = jnp.pad(xt.reshape(CIp, Q),
                 ((0, 0), (x_base, LX - x_base - Q))).astype(jnp.bfloat16)

    # Interior-validity mask over the Q canvas (re-padded per branch below).
    mq = jnp.pad(jnp.ones((N, H, W), jnp.float32),
                 ((0, 0), (pad, pad), (pad, pad))).reshape(1, Q)

    vmem_limit = _vmem_limit_bytes()
    outs = []
    for p in branch_params:
        k = p["k"]
        T = k * k
        pad_b = dilation * ((k - 1) // 2)
        M_b = pad_b * Wp + pad_b
        h_off = _round_up(M_b, 128) if M_b else 0    # 128-aligned halo margin
        L1 = Qp + 2 * h_off                          # intermediate canvas length
        x_off = x_base - h_off                       # 128-aligned base for conv1
        shifts = tuple((kh * dilation - pad_b) * Wp + (kw * dilation - pad_b)
                       for kh in range(k) for kw in range(k))

        mask_b = jnp.pad(mq, ((0, 0), (h_off, L1 - h_off - Q)))       # (1, L1)
        # Conv biases intentionally unused: a constant per-channel bias before
        # BatchNorm cancels exactly against the batch-mean subtraction.
        w1f = _fold_weight(p["w1"], k, Cin, CIp, Cconv, CC)
        w2f = _fold_weight(p["w2"], k, Cconv, CC, Cconv, CC)
        g1, be1 = _pad_bn(p["g1"], CC), _pad_bn(p["beta1"], CC)
        g2, be2 = _pad_bn(p["g2"], CC), _pad_bn(p["beta2"], CC)

        multi_tap = T > 1
        scratch = [pltpu.VMEM((CC, L1), jnp.float32),    # y1 (pre-BN, f32 stats)
                   pltpu.VMEM((CC, L1), jnp.bfloat16)]   # h1 (post BN1+ReLU)
        if multi_tap:
            scratch = ([pltpu.VMEM((T * CIp, L1), jnp.bfloat16)]      # cols1
                       + scratch
                       + [pltpu.VMEM((T * CC, Qp), jnp.bfloat16)])    # cols2

        kern = functools.partial(
            _branch_kernel, shifts=shifts, cin_p=CIp, cc_p=CC,
            x_off=x_off, h_off=h_off, q_len=Qp, l1_len=L1,
            count=count, eps=eps)

        k1, k2 = T * CIp, T * CC
        flops = 2 * CC * (k1 * L1 + k2 * Qp)
        bytes_accessed = (2 * (CIp * LX + CC * (k1 + k2))
                          + 4 * (L1 + 4 * CC + CC * Qp))

        out_b = pl.pallas_call(
            kern,
            out_shape=jax.ShapeDtypeStruct((CC, Qp), jnp.float32),
            grid_spec=pltpu.PrefetchScalarGridSpec(
                num_scalar_prefetch=0,
                grid=(1,),
                in_specs=[
                    pl.BlockSpec((CIp, LX), lambda i: (0, 0)),   # input canvas
                    pl.BlockSpec((1, L1), lambda i: (0, 0)),     # interior mask
                    pl.BlockSpec((CC, k1), lambda i: (0, 0)),    # folded w1
                    pl.BlockSpec((CC, k2), lambda i: (0, 0)),    # folded w2
                    pl.BlockSpec((CC, 1), lambda i: (0, 0)),
                    pl.BlockSpec((CC, 1), lambda i: (0, 0)),
                    pl.BlockSpec((CC, 1), lambda i: (0, 0)),
                    pl.BlockSpec((CC, 1), lambda i: (0, 0)),
                ],
                out_specs=pl.BlockSpec((CC, Qp), lambda i: (0, 0)),
                scratch_shapes=scratch),
            compiler_params=pltpu.CompilerParams(
                dimension_semantics=("arbitrary",),
                vmem_limit_bytes=vmem_limit),
            cost_estimate=pl.CostEstimate(flops=int(flops),
                                          transcendentals=int(2 * CC),
                                          bytes_accessed=int(bytes_accessed)),
        )(xe, mask_b, w1f, w2f, g1, be1, g2, be2)
        outs.append(out_b)

    # Branch sum + strip channel/lane/halo padding; back to NHWC.
    y = outs[0]
    for o in outs[1:]:
        y = y + o
    y = y[:Cconv, :Q].reshape(Cconv, N, Hp, Wp)[:, :, pad:pad + H, pad:pad + W]
    return jnp.transpose(y, (1, 2, 3, 0))


# ----------------------------------------------------------------------------
# Deterministic parameter init + pure-JAX reference check.
# ----------------------------------------------------------------------------
def init_block_params(key, in_channels, conv_channels, kernels):
    params = []
    for k in kernels:
        key, *ks = jax.random.split(key, 9)

        def conv_w(kk, cin, cout):
            return 0.1 * jax.random.normal(kk, (k * k, cin, cout), jnp.float32)

        params.append({
            "k": k,
            "w1": conv_w(ks[0], in_channels, conv_channels),
            "b1": 0.1 * jax.random.normal(ks[1], (conv_channels,), jnp.float32),
            "g1": 1.0 + 0.1 * jax.random.normal(ks[2], (conv_channels,), jnp.float32),
            "beta1": 0.1 * jax.random.normal(ks[3], (conv_channels,), jnp.float32),
            "w2": conv_w(ks[4], conv_channels, conv_channels),
            "b2": 0.1 * jax.random.normal(ks[5], (conv_channels,), jnp.float32),
            "g2": 1.0 + 0.1 * jax.random.normal(ks[6], (conv_channels,), jnp.float32),
            "beta2": 0.1 * jax.random.normal(ks[7], (conv_channels,), jnp.float32),
        })
    return params


def _ref_conv_bn_relu(x, w, b, gamma, beta, *, ksize, dilation, eps=1e-5):
    Cin, Cout = w.shape[1], w.shape[2]
    w_hwio = w.reshape(ksize, ksize, Cin, Cout)
    pad = dilation * ((ksize - 1) // 2)
    y = jax.lax.conv_general_dilated(
        x, w_hwio, window_strides=(1, 1),
        padding=[(pad, pad), (pad, pad)], rhs_dilation=(dilation, dilation),
        dimension_numbers=("NHWC", "HWIO", "NHWC"))
    y = y + b
    mean = jnp.mean(y, axis=(0, 1, 2), keepdims=True)
    var = jnp.mean((y - mean) ** 2, axis=(0, 1, 2), keepdims=True)
    y = (y - mean) * jax.lax.rsqrt(var + eps) * gamma + beta
    return jnp.maximum(y, 0.0)


def _ref_block(x, branch_params, dilation):
    y = None
    for p in branch_params:
        h = _ref_conv_bn_relu(x, p["w1"], p["b1"], p["g1"], p["beta1"],
                              ksize=p["k"], dilation=dilation)
        h = _ref_conv_bn_relu(h, p["w2"], p["b2"], p["g2"], p["beta2"],
                              ksize=p["k"], dilation=dilation)
        y = h if y is None else y + h
    return y


if __name__ == "__main__":
    # Block(in_channels=4, conv_channels=8, dilation=1, kernels=(1, 3)),
    # input (N=2, C=4, 16, 16) in PyTorch NCHW layout.
    N, Cin, H, W = 2, 4, 16, 16
    conv_channels = 8
    dilation = 1
    kernels = (1, 3)

    key = jax.random.PRNGKey(0)
    kx, kp = jax.random.split(key)
    x_nchw = jax.random.normal(kx, (N, Cin, H, W), jnp.float32)   # PyTorch layout
    x = jnp.transpose(x_nchw, (0, 2, 3, 1))                       # -> NHWC

    params = init_block_params(kp, Cin, conv_channels, kernels)

    y = jax.block_until_ready(block_forward(x, params, dilation))

    # Correctness check against a pure-JAX f32 reference (conv bias included
    # there; it cancels against the BatchNorm mean).  Tolerance is loosened
    # relative to the f32 kernel because matmul operands are now bf16.
    y_ref = jax.block_until_ready(_ref_block(x, params, dilation))
    np.testing.assert_allclose(np.asarray(y), np.asarray(y_ref),
                               rtol=5e-2, atol=5e-2)

    print("KERNEL_OK")
</pallas_src>

<mosaic_0001>
module attributes {stable_mosaic.version = 11 : i64} {
  func.func @_branch_kernel(%arg0: i32, %arg1: memref<16x1280xbf16, #tpu.memory_space<vmem>>, %arg2: memref<1x768xf32, #tpu.memory_space<vmem>>, %arg3: memref<16x16xbf16, #tpu.memory_space<vmem>>, %arg4: memref<16x16xbf16, #tpu.memory_space<vmem>>, %arg5: memref<16x1xf32, #tpu.memory_space<vmem>>, %arg6: memref<16x1xf32, #tpu.memory_space<vmem>>, %arg7: memref<16x1xf32, #tpu.memory_space<vmem>>, %arg8: memref<16x1xf32, #tpu.memory_space<vmem>>, %arg9: memref<16x768xf32, #tpu.memory_space<vmem>>, %arg10: memref<16x768xf32, #tpu.memory_space<vmem>>, %arg11: memref<16x768xbf16, #tpu.memory_space<vmem>>) attributes {dimension_semantics = [#tpu.dimension_semantics<arbitrary>], iteration_bounds = array<i64: 1>, scalar_prefetch = 0 : i64, scratch_operands = 2 : i64, tpu.core_type = #tpu.core_type<tc>, window_params = [{pipeline_mode = #tpu.pipeline_mode<synchronous>, transform_indices = @transform_0, window_bounds = array<i64: 16, 1280>}, {pipeline_mode = #tpu.pipeline_mode<synchronous>, transform_indices = @transform_1, window_bounds = array<i64: 1, 768>}, {pipeline_mode = #tpu.pipeline_mode<synchronous>, transform_indices = @transform_2, window_bounds = array<i64: 16, 16>}, {pipeline_mode = #tpu.pipeline_mode<synchronous>, transform_indices = @transform_3, window_bounds = array<i64: 16, 16>}, {pipeline_mode = #tpu.pipeline_mode<synchronous>, transform_indices = @transform_4, window_bounds = array<i64: 16, 1>}, {pipeline_mode = #tpu.pipeline_mode<synchronous>, transform_indices = @transform_5, window_bounds = array<i64: 16, 1>}, {pipeline_mode = #tpu.pipeline_mode<synchronous>, transform_indices = @transform_6, window_bounds = array<i64: 16, 1>}, {pipeline_mode = #tpu.pipeline_mode<synchronous>, transform_indices = @transform_7, window_bounds = array<i64: 16, 1>}, {pipeline_mode = #tpu.pipeline_mode<synchronous>, transform_indices = @transform_8, window_bounds = array<i64: 16, 768>}]} {
    %c0 = arith.constant 0 : index
    %c0_0 = arith.constant 0 : index
    %0 = vector.load %arg2[%c0, %c0_0] : memref<1x768xf32, #tpu.memory_space<vmem>>, vector<1x768xf32>
    %c0_1 = arith.constant 0 : index
    %c256 = arith.constant 256 : index
    %1 = vector.load %arg1[%c0_1, %c256] : memref<16x1280xbf16, #tpu.memory_space<vmem>>, vector<16x768xbf16>
    %c0_2 = arith.constant 0 : index
    %c0_3 = arith.constant 0 : index
    %2 = vector.load %arg3[%c0_2, %c0_3] : memref<16x16xbf16, #tpu.memory_space<vmem>>, vector<16x16xbf16>
    %cst = arith.constant dense<0.000000e+00> : vector<16x768xf32>
    %3 = tpu.matmul %2, %1, %cst {dimension_numbers = #tpu.dot_dimension_numbers<[1], [0], [0], [1], [0, 0, 1, 1], [], []>} : vector<16x16xbf16>, vector<16x768xbf16>, vector<16x768xf32> -> vector<16x768xf32>
    %c0_4 = arith.constant 0 : index
    %c0_5 = arith.constant 0 : index
    %4 = vector.load %arg10[%c0_4, %c0_5] : memref<16x768xf32, #tpu.memory_space<vmem>>, vector<16x768xf32>
    tpu.vector_store %arg10[%c0_4, %c0_5], %3 {strides = array<i32>} : memref<16x768xf32, #tpu.memory_space<vmem>>, vector<16x768xf32>,
    %c0_6 = arith.constant 0 : index
    %c0_7 = arith.constant 0 : index
    %5 = vector.load %arg10[%c0_6, %c0_7] : memref<16x768xf32, #tpu.memory_space<vmem>>, vector<16x768xf32>
    %6 = vector.broadcast %0 : vector<1x768xf32> to vector<16x768xf32>
    %7 = arith.mulf %5, %6 : vector<16x768xf32>
    %cst_8 = arith.constant dense<0.000000e+00> : vector<16xf32>
    %8 = vector.multi_reduction <add>, %7, %cst_8 [1] : vector<16x768xf32> to vector<16xf32>
    %9 = vector.shape_cast %8 : vector<16xf32> to vector<16x1xf32>
    %cst_9 = arith.constant 0.001953125 : f32
    %10 = vector.broadcast %cst_9 : f32 to vector<16x1xf32>
    %11 = arith.mulf %9, %10 : vector<16x1xf32>
    %12 = arith.mulf %7, %7 : vector<16x768xf32>
    %cst_10 = arith.constant dense<0.000000e+00> : vector<16xf32>
    %13 = vector.multi_reduction <add>, %12, %cst_10 [1] : vector<16x768xf32> to vector<16xf32>
    %14 = vector.shape_cast %13 : vector<16xf32> to vector<16x1xf32>
    %cst_11 = arith.constant 0.001953125 : f32
    %15 = vector.broadcast %cst_11 : f32 to vector<16x1xf32>
    %16 = arith.mulf %14, %15 : vector<16x1xf32>
    %17 = arith.mulf %11, %11 : vector<16x1xf32>
    %18 = arith.subf %16, %17 : vector<16x1xf32>
    %cst_12 = arith.constant 0.000000e+00 : f32
    %19 = vector.broadcast %cst_12 : f32 to vector<16x1xf32>
    %20 = arith.maximumf %18, %19 : vector<16x1xf32>
    %c0_13 = arith.constant 0 : index
    %c0_14 = arith.constant 0 : index
    %21 = vector.load %arg5[%c0_13, %c0_14] : memref<16x1xf32, #tpu.memory_space<vmem>>, vector<16x1xf32>
    %cst_15 = arith.constant 9.99999974E-6 : f32
    %22 = vector.broadcast %cst_15 : f32 to vector<16x1xf32>
    %23 = arith.addf %20, %22 : vector<16x1xf32>
    %24 = math.rsqrt %23 : vector<16x1xf32>
    %25 = arith.mulf %21, %24 : vector<16x1xf32>
    %c0_16 = arith.constant 0 : index
    %c0_17 = arith.constant 0 : index
    %26 = vector.load %arg6[%c0_16, %c0_17] : memref<16x1xf32, #tpu.memory_space<vmem>>, vector<16x1xf32>
    %27 = arith.mulf %11, %25 : vector<16x1xf32>
    %28 = arith.subf %26, %27 : vector<16x1xf32>
    %29 = vector.broadcast %25 : vector<16x1xf32> to vector<16x768xf32>
    %30 = arith.mulf %5, %29 : vector<16x768xf32>
    %31 = vector.broadcast %28 : vector<16x1xf32> to vector<16x768xf32>
    %32 = arith.addf %30, %31 : vector<16x768xf32>
    %cst_18 = arith.constant 0.000000e+00 : f32
    %33 = vector.broadcast %cst_18 : f32 to vector<16x768xf32>
    %34 = arith.maximumf %32, %33 : vector<16x768xf32>
    %35 = vector.broadcast %0 : vector<1x768xf32> to vector<16x768xf32>
    %36 = arith.mulf %34, %35 : vector<16x768xf32>
    %37 = arith.truncf %36 : vector<16x768xf32> to vector<16x768xbf16>
    %c0_19 = arith.constant 0 : index
    %c0_20 = arith.constant 0 : index
    %38 = vector.load %arg11[%c0_19, %c0_20] : memref<16x768xbf16, #tpu.memory_space<vmem>>, vector<16x768xbf16>
    tpu.vector_store %arg11[%c0_19, %c0_20], %37 {strides = array<i32>} : memref<16x768xbf16, #tpu.memory_space<vmem>>, vector<16x768xbf16>,
    %c0_21 = arith.constant 0 : index
    %c0_22 = arith.constant 0 : index
    %39 = vector.load %arg11[%c0_21, %c0_22] : memref<16x768xbf16, #tpu.memory_space<vmem>>, vector<16x768xbf16>
    %c0_23 = arith.constant 0 : index
    %c0_24 = arith.constant 0 : index
    %40 = vector.load %arg4[%c0_23, %c0_24] : memref<16x16xbf16, #tpu.memory_space<vmem>>, vector<16x16xbf16>
    %cst_25 = arith.constant dense<0.000000e+00> : vector<16x768xf32>
    %41 = tpu.matmul %40, %39, %cst_25 {dimension_numbers = #tpu.dot_dimension_numbers<[1], [0], [0], [1], [0, 0, 1, 1], [], []>} : vector<16x16xbf16>, vector<16x768xbf16>, vector<16x768xf32> -> vector<16x768xf32>
    %c0_26 = arith.constant 0 : index
    %c0_27 = arith.constant 0 : index
    %42 = vector.load %arg9[%c0_26, %c0_27] : memref<16x768xf32, #tpu.memory_space<vmem>>, vector<16x768xf32>
    tpu.vector_store %arg9[%c0_26, %c0_27], %41 {strides = array<i32>} : memref<16x768xf32, #tpu.memory_space<vmem>>, vector<16x768xf32>,
    %c0_28 = arith.constant 0 : index
    %c0_29 = arith.constant 0 : index
    %43 = vector.load %arg2[%c0_28, %c0_29] : memref<1x768xf32, #tpu.memory_space<vmem>>, vector<1x768xf32>
    %c0_30 = arith.constant 0 : index
    %c0_31 = arith.constant 0 : index
    %44 = vector.load %arg9[%c0_30, %c0_31] : memref<16x768xf32, #tpu.memory_space<vmem>>, vector<16x768xf32>
    %45 = vector.broadcast %43 : vector<1x768xf32> to vector<16x768xf32>
    %46 = arith.mulf %44, %45 : vector<16x768xf32>
    %cst_32 = arith.constant dense<0.000000e+00> : vector<16xf32>
    %47 = vector.multi_reduction <add>, %46, %cst_32 [1] : vector<16x768xf32> to vector<16xf32>
    %48 = vector.shape_cast %47 : vector<16xf32> to vector<16x1xf32>
    %cst_33 = arith.constant 0.001953125 : f32
    %49 = vector.broadcast %cst_33 : f32 to vector<16x1xf32>
    %50 = arith.mulf %48, %49 : vector<16x1xf32>
    %51 = arith.mulf %46, %46 : vector<16x768xf32>
    %cst_34 = arith.constant dense<0.000000e+00> : vector<16xf32>
    %52 = vector.multi_reduction <add>, %51, %cst_34 [1] : vector<16x768xf32> to vector<16xf32>
    %53 = vector.shape_cast %52 : vector<16xf32> to vector<16x1xf32>
    %cst_35 = arith.constant 0.001953125 : f32
    %54 = vector.broadcast %cst_35 : f32 to vector<16x1xf32>
    %55 = arith.mulf %53, %54 : vector<16x1xf32>
    %56 = arith.mulf %50, %50 : vector<16x1xf32>
    %57 = arith.subf %55, %56 : vector<16x1xf32>
    %cst_36 = arith.constant 0.000000e+00 : f32
    %58 = vector.broadcast %cst_36 : f32 to vector<16x1xf32>
    %59 = arith.maximumf %57, %58 : vector<16x1xf32>
    %c0_37 = arith.constant 0 : index
    %c0_38 = arith.constant 0 : index
    %60 = vector.load %arg7[%c0_37, %c0_38] : memref<16x1xf32, #tpu.memory_space<vmem>>, vector<16x1xf32>
    %cst_39 = arith.constant 9.99999974E-6 : f32
    %61 = vector.broadcast %cst_39 : f32 to vector<16x1xf32>
    %62 = arith.addf %59, %61 : vector<16x1xf32>
    %63 = math.rsqrt %62 : vector<16x1xf32>
    %64 = arith.mulf %60, %63 : vector<16x1xf32>
    %c0_40 = arith.constant 0 : index
    %c0_41 = arith.constant 0 : index
    %65 = vector.load %arg8[%c0_40, %c0_41] : memref<16x1xf32, #tpu.memory_space<vmem>>, vector<16x1xf32>
    %66 = arith.mulf %50, %64 : vector<16x1xf32>
    %67 = arith.subf %65, %66 : vector<16x1xf32>
    %68 = vector.broadcast %64 : vector<16x1xf32> to vector<16x768xf32>
    %69 = arith.mulf %44, %68 : vector<16x768xf32>
    %70 = vector.broadcast %67 : vector<16x1xf32> to vector<16x768xf32>
    %71 = arith.addf %69, %70 : vector<16x768xf32>
    %cst_42 = arith.constant 0.000000e+00 : f32
    %72 = vector.broadcast %cst_42 : f32 to vector<16x768xf32>
    %73 = arith.maximumf %71, %72 : vector<16x768xf32>
    %c0_43 = arith.constant 0 : index
    %c0_44 = arith.constant 0 : index
    %74 = vector.load %arg9[%c0_43, %c0_44] : memref<16x768xf32, #tpu.memory_space<vmem>>, vector<16x768xf32>
    tpu.vector_store %arg9[%c0_43, %c0_44], %73 {strides = array<i32>} : memref<16x768xf32, #tpu.memory_space<vmem>>, vector<16x768xf32>,
    return
  }
  func.func @transform_0(%arg0: i32) -> (i32, i32) {
    %c0_i32 = arith.constant 0 : i32
    %c0_i32_0 = arith.constant 0 : i32
    %c0_i32_1 = arith.constant 0 : i32
    return %c0_i32, %c0_i32_0 : i32, i32
  }
  func.func @transform_1(%arg0: i32) -> (i32, i32) {
    %c0_i32 = arith.constant 0 : i32
    %c0_i32_0 = arith.constant 0 : i32
    %c0_i32_1 = arith.constant 0 : i32
    return %c0_i32, %c0_i32_0 : i32, i32
  }
  func.func @transform_2(%arg0: i32) -> (i32, i32) {
    %c0_i32 = arith.constant 0 : i32
    %c0_i32_0 = arith.constant 0 : i32
    %c0_i32_1 = arith.constant 0 : i32
    return %c0_i32, %c0_i32_0 : i32, i32
  }
  func.func @transform_3(%arg0: i32) -> (i32, i32) {
    %c0_i32 = arith.constant 0 : i32
    %c0_i32_0 = arith.constant 0 : i32
    %c0_i32_1 = arith.constant 0 : i32
    return %c0_i32, %c0_i32_0 : i32, i32
  }
  func.func @transform_4(%arg0: i32) -> (i32, i32) {
    %c0_i32 = arith.constant 0 : i32
    %c0_i32_0 = arith.constant 0 : i32
    %c0_i32_1 = arith.constant 0 : i32
    return %c0_i32, %c0_i32_0 : i32, i32
  }
  func.func @transform_5(%arg0: i32) -> (i32, i32) {
    %c0_i32 = arith.constant 0 : i32
    %c0_i32_0 = arith.constant 0 : i32
    %c0_i32_1 = arith.constant 0 : i32
    return %c0_i32, %c0_i32_0 : i32, i32
  }
  func.func @transform_6(%arg0: i32) -> (i32, i32) {
    %c0_i32 = arith.constant 0 : i32
    %c0_i32_0 = arith.constant 0 : i32
    %c0_i32_1 = arith.constant 0 : i32
    return %c0_i32, %c0_i32_0 : i32, i32
  }
  func.func @transform_7(%arg0: i32) -> (i32, i32) {
    %c0_i32 = arith.constant 0 : i32
    %c0_i32_0 = arith.constant 0 : i32
    %c0_i32_1 = arith.constant 0 : i32
    return %c0_i32, %c0_i32_0 : i32, i32
  }
  func.func @transform_8(%arg0: i32) -> (i32, i32) {
    %c0_i32 = arith.constant 0 : i32
    %c0_i32_0 = arith.constant 0 : i32
    %c0_i32_1 = arith.constant 0 : i32
    return %c0_i32, %c0_i32_0 : i32, i32
  }
}

</mosaic_0001>

<llo_original>
// kernel: tpu_custom_call.1
$region0: #{tpu_custom_call.1}
  #allocation0 [shape = 'u32[]', space=smem, size = 0x4, offset = 0x4, fixed_abs, tag = 'smem constant byte address 0x4 - core index']
  #allocation1 [shape = 'u32[144,128]{1,0:T(1,128)}', space=vmem, size = 0x12000, scoped, tag = 'internal scratch']
  #allocation2 [shape = 'f32[16,768]{1,0:T(8,128)}', space=vmem, size = 0xc000, scoped, tag = 'scratch operand']
  #allocation3 [shape = 'bf16[16,768]{1,0:T(16,128)(2,1)}', space=vmem, size = 0x6000, scoped, tag = 'scratch operand']
  %s0 = inlined_call_operand.hbm [shape: bf16[16,1280], index: 0, kind: input, shape index: {}]
  %s1 = inlined_call_operand.hbm [shape: f32[1,768], index: 1, kind: input, shape index: {}]
  %s2 = inlined_call_operand.hbm [shape: bf16[16,16], index: 2, kind: input, shape index: {}]
  %s3 = inlined_call_operand.hbm [shape: bf16[16,16], index: 3, kind: input, shape index: {}]
  %s4 = inlined_call_operand.hbm [shape: f32[16,1], index: 4, kind: input, shape index: {}]
  %s5 = inlined_call_operand.hbm [shape: f32[16,1], index: 5, kind: input, shape index: {}]
  %s6 = inlined_call_operand.hbm [shape: f32[16,1], index: 6, kind: input, shape index: {}]
  %s7 = inlined_call_operand.hbm [shape: f32[16,1], index: 7, kind: input, shape index: {}]
  %s8 = inlined_call_operand.hbm [shape: f32[16,768], index: 8, kind: output, shape index: {}]
  %s9 = sld [smem:[#allocation0]]
  $region74: #{tpu_custom_call.1} parent=0
    _
  %s11 = ssub.s32 1, %s9
  %s12 = scalar_select 0, %s11, %s9
  $region1: #{tpu_custom_call.1} parent=0
    #allocation4 [shape = 'u8[40960]{0}', space=vmem, size = 0xa000, scoped, tag = 'input window, operand 0, single buffered']
    #allocation5 [shape = 's32[1]{0}', space=sflag, size = 0x4, scoped, tag = 'scoped memory for tpu_custom_call.1']
    #allocation6 [shape = 's32[1]{0}', space=sflag, size = 0x4, scoped, tag = 'scoped memory for tpu_custom_call.1']
    #allocation7 [shape = 'u8[3072]{0}', space=vmem, size = 0xc00, scoped, tag = 'input window, operand 1, single buffered']
    #allocation8 [shape = 's32[1]{0}', space=sflag, size = 0x4, scoped, tag = 'scoped memory for tpu_custom_call.1']
    #allocation9 [shape = 'u8[4096]{0}', space=vmem, size = 0x1000, scoped, tag = 'input window, operand 2, single buffered']
    #allocation10 [shape = 'u8[4096]{0}', space=vmem, size = 0x1000, scoped, tag = 'input window, operand 3, single buffered']
    #allocation11 [shape = 's32[1]{0}', space=sflag, size = 0x4, scoped, tag = 'scoped memory for tpu_custom_call.1']
    #allocation12 [shape = 'u8[8192]{0}', space=vmem, size = 0x2000, scoped, tag = 'input window, operand 4, single buffered']
    #allocation13 [shape = 'u8[8192]{0}', space=vmem, size = 0x2000, scoped, tag = 'input window, operand 5, single buffered']
    #allocation14 [shape = 's32[1]{0}', space=sflag, size = 0x4, scoped, tag = 'scoped memory for tpu_custom_call.1']
    #allocation15 [shape = 'u8[8192]{0}', space=vmem, size = 0x2000, scoped, tag = 'input window, operand 6, single buffered']
    #allocation16 [shape = 'u8[8192]{0}', space=vmem, size = 0x2000, scoped, tag = 'input window, operand 7, single buffered']
    #allocation17 [shape = 's32[1]{0}', space=sflag, size = 0x4, scoped, tag = 'scoped memory for tpu_custom_call.1']
    #allocation18 [shape = 'u8[49152]{0}', space=vmem, size = 0xc000, scoped, tag = 'output window, operand 0, single buffered']
    %13 = vsyncpa [#allocation5], 0
    %14 = vsyncpa [#allocation8], 0
    %15 = vsyncpa [#allocation11], 0
    %16 = vsyncpa [#allocation14], 0
    %17 = vsyncpa [#allocation17], 0
    %18 = vsyncpa [#allocation6], 0
    // Predicated region
    $region2: #{tpu_custom_call.1} parent=1 // pred_check
      _
    $region3: #{tpu_custom_call.1} parent=1 // pred_check_branch
      %20 = sbr.rel (0) target = $region5
    $region4: #{tpu_custom_call.1} parent=1 // pred_region
      %s22 = ssub.s32 1280, 1280
      %23 = vsyncadd [#allocation5], %s22
      %s24 = sshll.u32 [#allocation4], 4
      %s25 = int_to_ptr.vmem [resolvable:$true] %s24
      %30 = dma.hbm_to_vmem [thread:$0]  %s0, 1280, %s25, [#allocation5], 640, 640, 40
    $region5: #{tpu_custom_call.1} parent=1 // pred_fallthru
      _
    // Predicated region
    $region6: #{tpu_custom_call.1} parent=1 // pred_check
      _
    $region7: #{tpu_custom_call.1} parent=1 // pred_check_branch
      %32 = sbr.rel (0) target = $region9
    $region8: #{tpu_custom_call.1} parent=1 // pred_region
      %s34 = ssub.s32 96, 96
      %35 = vsyncadd [#allocation8], %s34
      %s37 = sshll.u32 [#allocation7], 4
      %s38 = int_to_ptr.vmem [resolvable:$true] %s37
      %40 = dma.hbm_to_vmem [thread:$0]  %s1, 96, %s38, [#allocation8]
    $region9: #{tpu_custom_call.1} parent=1 // pred_fallthru
      _
    // Predicated region
    $region10: #{tpu_custom_call.1} parent=1 // pred_check
      _
    $region11: #{tpu_custom_call.1} parent=1 // pred_check_branch
      %42 = sbr.rel (0) target = $region13
    $region12: #{tpu_custom_call.1} parent=1 // pred_region
      %s44 = ssub.s32 128, 128
      %45 = vsyncadd [#allocation8], %s44
      %s46 = sshll.u32 [#allocation9], 4
      %s47 = int_to_ptr.vmem [resolvable:$true] %s46
      %52 = dma.hbm_to_vmem [thread:$0]  %s2, 128, %s47, [#allocation8], 64, 64, 4
    $region13: #{tpu_custom_call.1} parent=1 // pred_fallthru
      _
    // Predicated region
    $region14: #{tpu_custom_call.1} parent=1 // pred_check
      _
    $region15: #{tpu_custom_call.1} parent=1 // pred_check_branch
      %54 = sbr.rel (0) target = $region17
    $region16: #{tpu_custom_call.1} parent=1 // pred_region
      %s56 = ssub.s32 128, 128
      %57 = vsyncadd [#allocation11], %s56
      %s58 = sshll.u32 [#allocation10], 4
      %s59 = int_to_ptr.vmem [resolvable:$true] %s58
      %64 = dma.hbm_to_vmem [thread:$0]  %s3, 128, %s59, [#allocation11], 64, 64, 4
    $region17: #{tpu_custom_call.1} parent=1 // pred_fallthru
      _
    // Predicated region
    $region18: #{tpu_custom_call.1} parent=1 // pred_check
      _
    $region19: #{tpu_custom_call.1} parent=1 // pred_check_branch
      %66 = sbr.rel (0) target = $region21
    $region20: #{tpu_custom_call.1} parent=1 // pred_region
      %s68 = ssub.s32 256, 256
      %69 = vsyncadd [#allocation11], %s68
      %s70 = sshll.u32 [#allocation12], 4
      %s71 = int_to_ptr.vmem [resolvable:$true] %s70
      %76 = dma.hbm_to_vmem [thread:$0]  %s4, 256, %s71, [#allocation11], 128, 128, 8
    $region21: #{tpu_custom_call.1} parent=1 // pred_fallthru
      _
    // Predicated region
    $region22: #{tpu_custom_call.1} parent=1 // pred_check
      _
    $region23: #{tpu_custom_call.1} parent=1 // pred_check_branch
      %78 = sbr.rel (0) target = $region25
    $region24: #{tpu_custom_call.1} parent=1 // pred_region
      %s80 = ssub.s32 256, 256
      %81 = vsyncadd [#allocation14], %s80
      %s82 = sshll.u32 [#allocation13], 4
      %s83 = int_to_ptr.vmem [resolvable:$true] %s82
      %88 = dma.hbm_to_vmem [thread:$0]  %s5, 256, %s83, [#allocation14], 128, 128, 8
    $region25: #{tpu_custom_call.1} parent=1 // pred_fallthru
      _
    // Predicated region
    $region26: #{tpu_custom_call.1} parent=1 // pred_check
      _
    $region27: #{tpu_custom_call.1} parent=1 // pred_check_branch
      %90 = sbr.rel (0) target = $region29
    $region28: #{tpu_custom_call.1} parent=1 // pred_region
      %s92 = ssub.s32 256, 256
      %93 = vsyncadd [#allocation14], %s92
      %s94 = sshll.u32 [#allocation15], 4
      %s95 = int_to_ptr.vmem [resolvable:$true] %s94
      %100 = dma.hbm_to_vmem [thread:$0]  %s6, 256, %s95, [#allocation14], 128, 128, 8
    $region29: #{tpu_custom_call.1} parent=1 // pred_fallthru
      _
    // Predicated region
    $region30: #{tpu_custom_call.1} parent=1 // pred_check
      _
    $region31: #{tpu_custom_call.1} parent=1 // pred_check_branch
      %102 = sbr.rel (0) target = $region33
    $region32: #{tpu_custom_call.1} parent=1 // pred_region
      %s104 = ssub.s32 256, 256
      %105 = vsyncadd [#allocation17], %s104
      %s106 = sshll.u32 [#allocation16], 4
      %s107 = int_to_ptr.vmem [resolvable:$true] %s106
      %112 = dma.hbm_to_vmem [thread:$0]  %s7, 256, %s107, [#allocation17], 128, 128, 8
    $region33: #{tpu_custom_call.1} parent=1 // pred_fallthru
      _
    // Predicated region
    $region34: #{tpu_custom_call.1} parent=1 // pred_check
      _
    $region35: #{tpu_custom_call.1} parent=1 // pred_check_branch
      %114 = sbr.rel (0) target = $region37
    $region36: #{tpu_custom_call.1} parent=1 // pred_region
      %115 = dma.done [#allocation5], 1280
    $region37: #{tpu_custom_call.1} parent=1 // pred_fallthru
      _
    // Predicated region
    $region38: #{tpu_custom_call.1} parent=1 // pred_check
      _
    $region39: #{tpu_custom_call.1} parent=1 // pred_check_branch
      %117 = sbr.rel (0) target = $region41
    $region40: #{tpu_custom_call.1} parent=1 // pred_region
      %118 = dma.done [#allocation8], 96
    $region41: #{tpu_custom_call.1} parent=1 // pred_fallthru
      _
    // Predicated region
    $region42: #{tpu_custom_call.1} parent=1 // pred_check
      _
    $region43: #{tpu_custom_call.1} parent=1 // pred_check_branch
      %120 = sbr.rel (0) target = $region45
    $region44: #{tpu_custom_call.1} parent=1 // pred_region
      %121 = dma.done [#allocation8], 128
    $region45: #{tpu_custom_call.1} parent=1 // pred_fallthru
      _
    // Predicated region
    $region46: #{tpu_custom_call.1} parent=1 // pred_check
      _
    $region47: #{tpu_custom_call.1} parent=1 // pred_check_branch
      %123 = sbr.rel (0) target = $region49
    $region48: #{tpu_custom_call.1} parent=1 // pred_region
      %124 = dma.done [#allocation11], 128
    $region49: #{tpu_custom_call.1} parent=1 // pred_fallthru
      _
    // Predicated region
    $region50: #{tpu_custom_call.1} parent=1 // pred_check
      _
    $region51: #{tpu_custom_call.1} parent=1 // pred_check_branch
      %126 = sbr.rel (0) target = $region53
    $region52: #{tpu_custom_call.1} parent=1 // pred_region
      %127 = dma.done [#allocation11], 256
    $region53: #{tpu_custom_call.1} parent=1 // pred_fallthru
      _
    // Predicated region
    $region54: #{tpu_custom_call.1} parent=1 // pred_check
      _
    $region55: #{tpu_custom_call.1} parent=1 // pred_check_branch
      %129 = sbr.rel (0) target = $region57
    $region56: #{tpu_custom_call.1} parent=1 // pred_region
      %130 = dma.done [#allocation14], 256
    $region57: #{tpu_custom_call.1} parent=1 // pred_fallthru
      _
    // Predicated region
    $region58: #{tpu_custom_call.1} parent=1 // pred_check
      _
    $region59: #{tpu_custom_call.1} parent=1 // pred_check_branch
      %132 = sbr.rel (0) target = $region61
    $region60: #{tpu_custom_call.1} parent=1 // pred_region
      %133 = dma.done [#allocation14], 256
    $region61: #{tpu_custom_call.1} parent=1 // pred_fallthru
      _
    // Predicated region
    $region62: #{tpu_custom_call.1} parent=1 // pred_check
      _
    $region63: #{tpu_custom_call.1} parent=1 // pred_check_branch
      %135 = sbr.rel (0) target = $region65
    $region64: #{tpu_custom_call.1} parent=1 // pred_region
      %136 = dma.done [#allocation17], 256
    $region65: #{tpu_custom_call.1} parent=1 // pred_fallthru
      _
    %v138 = vld [vmem:[#allocation7] sm:$0x3f]
    %v139 = vld [vmem:[#allocation4 + $0x8] sm:$0xff]
    %v140 = vld [vmem:[#allocation4 + $0x10] sm:$0xff]
    %v141 = vld [vmem:[#allocation4 + $0x18] sm:$0xff]
    %v142 = vld [vmem:[#allocation4 + $0x30] sm:$0xff]
    %v143 = vld [vmem:[#allocation4 + $0x38] sm:$0xff]
    %v144 = vld [vmem:[#allocation4 + $0x40] sm:$0xff]
    %v145 = vld [vmem:[#allocation9] sm:$0xf]
    %v146 = vld [vmem:[#allocation9 + $0x4] sm:$0xf]
    %v149 = vunpack.c.l.b16 %v145
    %v150 = vunpack.c.l.b16 %v146
    %v151 = vpack.c.b16 %v150, %v149
    %v158 = vunpack.c.l.b16 %v139
    %v159 = vunpack.c.h.b16 %v139
    %v160 = vunpack.c.l.b16 %v140
    %v161 = vunpack.c.h.b16 %v140
    %v162 = vunpack.c.l.b16 %v141
    %v163 = vunpack.c.h.b16 %v141
    %v164 = vunpack.c.l.b16 %v142
    %v165 = vunpack.c.h.b16 %v142
    %v166 = vunpack.c.l.b16 %v143
    %v167 = vunpack.c.h.b16 %v143
    %v168 = vunpack.c.l.b16 %v144
    %v169 = vunpack.c.h.b16 %v144
    %v170 = vpack.c.b16 %v164, %v158
    %v171 = vpack.c.b16 %v165, %v159
    %v172 = vpack.c.b16 %v166, %v160
    %v173 = vpack.c.b16 %v167, %v161
    %v174 = vpack.c.b16 %v168, %v162
    %v175 = vpack.c.b16 %v169, %v163
    %vm182 = vcmask 130048
    %v184 = vsel %vm182, %v151, 0
    %186 = vmatprep.subr.bf16.mxu0 %v171
    %187 = vmatpush1.bf16.msra.mxu0 %v170
    %188 = vmatprep.subr.bf16.mxu0 0
    %189 = vmatpush1.bf16.msra.mxu0 0
    %190 = vmatprep.subr.bf16.mxu0 0
    %191 = vmatpush1.bf16.msra.mxu0 0
    %192 = vmatprep.subr.bf16.mxu0 0
    %193 = vmatpush1.bf16.msra.mxu0 0
    %194 = vmatprep.subr.bf16.mxu0 0
    %195 = vmatpush1.bf16.msra.mxu0 0
    %196 = vmatprep.subr.bf16.mxu0 0
    %197 = vmatpush1.bf16.msra.mxu0 0
    %198 = vmatprep.subr.bf16.mxu0 0
    %199 = vmatpush1.bf16.msra.mxu0 0
    %200 = vmatprep.subr.bf16.mxu0 0
    %201 = vmatpush1.bf16.msra.mxu0 0
    %202 = vmatprep.subr.bf16.mxu0 0
    %203 = vmatpush1.bf16.msra.mxu0 0
    %204 = vmatprep.subr.bf16.mxu0 0
    %205 = vmatpush1.bf16.msra.mxu0 0
    %206 = vmatprep.subr.bf16.mxu0 0
    %207 = vmatpush1.bf16.msra.mxu0 0
    %208 = vmatprep.subr.bf16.mxu0 0
    %209 = vmatpush1.bf16.msra.mxu0 0
    %210 = vmatprep.subr.bf16.mxu0 0
    %211 = vmatpush1.bf16.msra.mxu0 0
    %212 = vmatprep.subr.bf16.mxu0 0
    %213 = vmatpush1.bf16.msra.mxu0 0
    %214 = vmatprep.subr.bf16.mxu0 0
    %215 = vmatpush1.bf16.msra.mxu0 0
    %216 = vmatprep.subr.bf16.mxu0 0
    %217 = vmatpush1.bf16.msra.mxu0 0
    %218 = vmatprep.mubr.bf16.mxu0 0
    %219 = vmatmul.mubr.bf16.gmra.mrb[0].mxu0 %v184
    %v220 = vpop.f32.mrb[0].mxu0
    %v221 = vadd.f32 0.0, %v220
    %v222 = vpop.f32.mrb[0].mxu0
    %v223 = vadd.f32 0.0, %v222
    %v224 = vpop.f32.mrb[0].mxu0
    %v225 = vadd.f32 0.0, %v224
    %v226 = vpop.f32.mrb[0].mxu0
    %v227 = vadd.f32 0.0, %v226
    %228 = vdwg.mxu0
    %229 = vmatprep.subr.bf16.mxu0 %v173
    %230 = vmatpush1.bf16.msra.mxu0 %v172
    %231 = vmatprep.subr.bf16.mxu0 0
    %232 = vmatpush1.bf16.msra.mxu0 0
    %233 = vmatprep.subr.bf16.mxu0 0
    %234 = vmatpush1.bf16.msra.mxu0 0
    %235 = vmatprep.subr.bf16.mxu0 0
    %236 = vmatpush1.bf16.msra.mxu0 0
    %237 = vmatprep.subr.bf16.mxu0 0
    %238 = vmatpush1.bf16.msra.mxu0 0
    %239 = vmatprep.subr.bf16.mxu0 0
    %240 = vmatpush1.bf16.msra.mxu0 0
    %241 = vmatprep.subr.bf16.mxu0 0
    %242 = vmatpush1.bf16.msra.mxu0 0
    %243 = vmatprep.subr.bf16.mxu0 0
    %244 = vmatpush1.bf16.msra.mxu0 0
    %245 = vmatprep.subr.bf16.mxu0 0
    %246 = vmatpush1.bf16.msra.mxu0 0
    %247 = vmatprep.subr.bf16.mxu0 0
    %248 = vmatpush1.bf16.msra.mxu0 0
    %249 = vmatprep.subr.bf16.mxu0 0
    %250 = vmatpush1.bf16.msra.mxu0 0
    %251 = vmatprep.subr.bf16.mxu0 0
    %252 = vmatpush1.bf16.msra.mxu0 0
    %253 = vmatprep.subr.bf16.mxu0 0
    %254 = vmatpush1.bf16.msra.mxu0 0
    %255 = vmatprep.subr.bf16.mxu0 0
    %256 = vmatpush1.bf16.msra.mxu0 0
    %257 = vmatprep.subr.bf16.mxu0 0
    %258 = vmatpush1.bf16.msra.mxu0 0
    %259 = vmatprep.subr.bf16.mxu0 0
    %260 = vmatpush1.bf16.msra.mxu0 0
    %261 = vmatprep.mubr.bf16.mxu0 0
    %262 = vmatmul.mubr.bf16.gmra.mrb[0].mxu0 %v184
    %v263 = vpop.f32.mrb[0].mxu0
    %v264 = vadd.f32 0.0, %v263
    %v265 = vpop.f32.mrb[0].mxu0
    %v266 = vadd.f32 0.0, %v265
    %v267 = vpop.f32.mrb[0].mxu0
    %v268 = vadd.f32 0.0, %v267
    %v269 = vpop.f32.mrb[0].mxu0
    %v270 = vadd.f32 0.0, %v269
    %271 = vdwg.mxu0
    %272 = vmatprep.subr.bf16.mxu0 %v175
    %273 = vmatpush1.bf16.msra.mxu0 %v174
    %274 = vmatprep.subr.bf16.mxu0 0
    %275 = vmatpush1.bf16.msra.mxu0 0
    %276 = vmatprep.subr.bf16.mxu0 0
    %277 = vmatpush1.bf16.msra.mxu0 0
    %278 = vmatprep.subr.bf16.mxu0 0
    %279 = vmatpush1.bf16.msra.mxu0 0
    %280 = vmatprep.subr.bf16.mxu0 0
    %281 = vmatpush1.bf16.msra.mxu0 0
    %282 = vmatprep.subr.bf16.mxu0 0
    %283 = vmatpush1.bf16.msra.mxu0 0
    %284 = vmatprep.subr.bf16.mxu0 0
    %285 = vmatpush1.bf16.msra.mxu0 0
    %286 = vmatprep.subr.bf16.mxu0 0
    %287 = vmatpush1.bf16.msra.mxu0 0
    %288 = vmatprep.subr.bf16.mxu0 0
    %289 = vmatpush1.bf16.msra.mxu0 0
    %290 = vmatprep.subr.bf16.mxu0 0
    %291 = vmatpush1.bf16.msra.mxu0 0
    %292 = vmatprep.subr.bf16.mxu0 0
    %293 = vmatpush1.bf16.msra.mxu0 0
    %294 = vmatprep.subr.bf16.mxu0 0
    %295 = vmatpush1.bf16.msra.mxu0 0
    %296 = vmatprep.subr.bf16.mxu0 0
    %297 = vmatpush1.bf16.msra.mxu0 0
    %298 = vmatprep.subr.bf16.mxu0 0
    %299 = vmatpush1.bf16.msra.mxu0 0
    %300 = vmatprep.subr.bf16.mxu0 0
    %301 = vmatpush1.bf16.msra.mxu0 0
    %302 = vmatprep.subr.bf16.mxu0 0
    %303 = vmatpush1.bf16.msra.mxu0 0
    %304 = vmatprep.mubr.bf16.mxu0 0
    %305 = vmatmul.mubr.bf16.gmra.mrb[0].mxu0 %v184
    %v306 = vpop.f32.mrb[0].mxu0
    %v307 = vadd.f32 0.0, %v306
    %v308 = vpop.f32.mrb[0].mxu0
    %v309 = vadd.f32 0.0, %v308
    %v310 = vpop.f32.mrb[0].mxu0
    %v311 = vadd.f32 0.0, %v310
    %v312 = vpop.f32.mrb[0].mxu0
    %v313 = vadd.f32 0.0, %v312
    %314 = vdwg.mxu0
    %315 = vst [vmem:[#allocation2] sm:$0xff] %v221
    %316 = vst [vmem:[#allocation2 + $0x8] sm:$0xff] %v223
    %317 = vst [vmem:[#allocation2 + $0x10] sm:$0xff] %v264
    %318 = vst [vmem:[#allocation2 + $0x18] sm:$0xff] %v266
    %319 = vst [vmem:[#allocation2 + $0x20] sm:$0xff] %v307
    %320 = vst [vmem:[#allocation2 + $0x28] sm:$0xff] %v309
    %321 = vst [vmem:[#allocation2 + $0x30] sm:$0xff] %v225
    %322 = vst [vmem:[#allocation2 + $0x38] sm:$0xff] %v227
    %323 = vst [vmem:[#allocation2 + $0x40] sm:$0xff] %v268
    %324 = vst [vmem:[#allocation2 + $0x48] sm:$0xff] %v270
    %325 = vst [vmem:[#allocation2 + $0x50] sm:$0xff] %v311
    %326 = vst [vmem:[#allocation2 + $0x58] sm:$0xff] %v313
    %v327 = vld [vmem:[#allocation2] sm:$0xff]
    %v328 = vld [vmem:[#allocation2 + $0x8] sm:$0xff]
    %v329 = vld [vmem:[#allocation2 + $0x10] sm:$0xff]
    %v330 = vld [vmem:[#allocation2 + $0x18] sm:$0xff]
    %v331 = vld [vmem:[#allocation2 + $0x20] sm:$0xff]
    %v332 = vld [vmem:[#allocation2 + $0x28] sm:$0xff]
    %v333 = vld [vmem:[#allocation2 + $0x30] sm:$0xff]
    %v334 = vld [vmem:[#allocation2 + $0x38] sm:$0xff]
    %v335 = vld [vmem:[#allocation2 + $0x40] sm:$0xff]
    %v336 = vld [vmem:[#allocation2 + $0x48] sm:$0xff]
    %v337 = vld [vmem:[#allocation2 + $0x50] sm:$0xff]
    %v338 = vld [vmem:[#allocation2 + $0x58] sm:$0xff]
    %v340 = vlaneseq
    %v341 = vshrl.u32 %v340, 7
    %v342 = vsub.s32 0, %v341
    %v343 = vrot.slane %v138, %v342
    %v344 = vlaneseq
    %v345 = vshrl.u32 %v344, 7
    %v346 = vsub.s32 1, %v345
    %v347 = vrot.slane %v138, %v346
    %v348 = vlaneseq
    %v349 = vshrl.u32 %v348, 7
    %v350 = vsub.s32 2, %v349
    %v351 = vrot.slane %v138, %v350
    %v352 = vlaneseq
    %v353 = vshrl.u32 %v352, 7
    %v354 = vsub.s32 3, %v353
    %v355 = vrot.slane %v138, %v354
    %v356 = vlaneseq
    %v357 = vshrl.u32 %v356, 7
    %v358 = vsub.s32 4, %v357
    %v359 = vrot.slane %v138, %v358
    %v360 = vlaneseq
    %v361 = vshrl.u32 %v360, 7
    %v362 = vsub.s32 5, %v361
    %v363 = vrot.slane %v138, %v362
    %v370 = vmul.f32 %v327, %v343
    %v371 = vmul.f32 %v328, %v347
    %v372 = vmul.f32 %v329, %v351
    %v373 = vmul.f32 %v330, %v355
    %v374 = vmul.f32 %v331, %v359
    %v375 = vmul.f32 %v332, %v363
    %v376 = vmul.f32 %v333, %v343
    %v377 = vmul.f32 %v334, %v347
    %v378 = vmul.f32 %v335, %v351
    %v379 = vmul.f32 %v336, %v355
    %v380 = vmul.f32 %v337, %v359
    %v381 = vmul.f32 %v338, %v363
    %v382 = vadd.f32 %v370, %v371
    %v383 = vadd.f32 %v382, %v372
    %v384 = vadd.f32 %v383, %v373
    %v385 = vadd.f32 %v384, %v374
    %v386 = vadd.f32 %v385, %v375
    %387 = vadd.xlane.f32.xlu0 %v386
    %v388 = vpop.xlane.xlu0 %387
    %v389 = vadd.f32 %v376, %v377
    %v390 = vadd.f32 %v389, %v378
    %v391 = vadd.f32 %v390, %v379
    %v392 = vadd.f32 %v391, %v380
    %v393 = vadd.f32 %v392, %v381
    %394 = vadd.xlane.f32.xlu0 %v393
    %v395 = vpop.xlane.xlu0 %394
    %v396 = vmul.f32 %v388, 0.001953125
    %v397 = vmul.f32 %v395, 0.001953125
    %v398 = vmul.f32 %v370, %v370
    %v399 = vmul.f32 %v371, %v371
    %v400 = vmul.f32 %v372, %v372
    %v401 = vmul.f32 %v373, %v373
    %v402 = vmul.f32 %v374, %v374
    %v403 = vmul.f32 %v375, %v375
    %v404 = vmul.f32 %v376, %v376
    %v405 = vmul.f32 %v377, %v377
    %v406 = vmul.f32 %v378, %v378
    %v407 = vmul.f32 %v379, %v379
    %v408 = vmul.f32 %v380, %v380
    %v409 = vmul.f32 %v381, %v381
    %v410 = vadd.f32 %v398, %v399
    %v411 = vadd.f32 %v410, %v400
    %v412 = vadd.f32 %v411, %v401
    %v413 = vadd.f32 %v412, %v402
    %v414 = vadd.f32 %v413, %v403
    %415 = vadd.xlane.f32.xlu0 %v414
    %v416 = vpop.xlane.xlu0 %415
    %v417 = vadd.f32 %v404, %v405
    %v418 = vadd.f32 %v417, %v406
    %v419 = vadd.f32 %v418, %v407
    %v420 = vadd.f32 %v419, %v408
    %v421 = vadd.f32 %v420, %v409
    %422 = vadd.xlane.f32.xlu0 %v421
    %v423 = vpop.xlane.xlu0 %422
    %v424 = vmul.f32 %v416, 0.001953125
    %v425 = vmul.f32 %v423, 0.001953125
    %v426 = vmul.f32 %v396, %v396
    %v427 = vmul.f32 %v397, %v397
    %v428 = vsub.f32 %v424, %v426
    %v429 = vsub.f32 %v425, %v427
    %v430 = vmax.f32 %v428, 0.0
    %v431 = vmax.f32 %v429, 0.0
    %v432 = vld [vmem:[#allocation12] sm:$0xff]
    %v433 = vld [vmem:[#allocation12 + $0x8] sm:$0xff]
    %v434 = vadd.f32 %v430, 1e-05
    %v435 = vadd.f32 %v431, 1e-05
    %v436 = vrsqrt.pop %v434
    %v437 = vrsqrt.pop %v435
    %v438 = vmul.f32 %v432, %v436
    %v439 = vmul.f32 %v433, %v437
    %v440 = vld [vmem:[#allocation13] sm:$0xff]
    %v441 = vld [vmem:[#allocation13 + $0x8] sm:$0xff]
    %v442 = vmul.f32 %v396, %v438
    %v443 = vmul.f32 %v397, %v439
    %v444 = vsub.f32 %v440, %v442
    %v445 = vsub.f32 %v441, %v443
    %447 = vset.pattern.permute.xlu0 0
    %448 = vperm.xlu0 %447, %v438
    %v449 = vpop.permute.xlu0 %448
    %452 = vset.pattern.permute.xlu0 0
    %453 = vperm.xlu0 %452, %v439
    %v454 = vpop.permute.xlu0 %453
    %v456 = vmul.f32 %v327, %v449
    %v457 = vmul.f32 %v328, %v449
    %v458 = vmul.f32 %v329, %v449
    %v459 = vmul.f32 %v330, %v449
    %v460 = vmul.f32 %v331, %v449
    %v461 = vmul.f32 %v332, %v449
    %v462 = vmul.f32 %v333, %v454
    %v463 = vmul.f32 %v334, %v454
    %v464 = vmul.f32 %v335, %v454
    %v465 = vmul.f32 %v336, %v454
    %v466 = vmul.f32 %v337, %v454
    %v467 = vmul.f32 %v338, %v454
    %469 = vset.pattern.permute.xlu0 0
    %470 = vperm.xlu0 %469, %v444
    %v471 = vpop.permute.xlu0 %470
    %474 = vset.pattern.permute.xlu0 0
    %475 = vperm.xlu0 %474, %v445
    %v476 = vpop.permute.xlu0 %475
    %v478 = vadd.f32 %v456, %v471
    %v479 = vadd.f32 %v457, %v471
    %v480 = vadd.f32 %v458, %v471
    %v481 = vadd.f32 %v459, %v471
    %v482 = vadd.f32 %v460, %v471
    %v483 = vadd.f32 %v461, %v471
    %v484 = vadd.f32 %v462, %v476
    %v485 = vadd.f32 %v463, %v476
    %v486 = vadd.f32 %v464, %v476
    %v487 = vadd.f32 %v465, %v476
    %v488 = vadd.f32 %v466, %v476
    %v489 = vadd.f32 %v467, %v476
    %v490 = vmax.f32 %v478, 0.0
    %v491 = vmax.f32 %v479, 0.0
    %v492 = vmax.f32 %v480, 0.0
    %v493 = vmax.f32 %v481, 0.0
    %v494 = vmax.f32 %v482, 0.0
    %v495 = vmax.f32 %v483, 0.0
    %v496 = vmax.f32 %v484, 0.0
    %v497 = vmax.f32 %v485, 0.0
    %v498 = vmax.f32 %v486, 0.0
    %v499 = vmax.f32 %v487, 0.0
    %v500 = vmax.f32 %v488, 0.0
    %v501 = vmax.f32 %v489, 0.0
    %v502 = vmul.f32 %v490, %v343
    %v503 = vmul.f32 %v491, %v347
    %v504 = vmul.f32 %v492, %v351
    %v505 = vmul.f32 %v493, %v355
    %v506 = vmul.f32 %v494, %v359
    %v507 = vmul.f32 %v495, %v363
    %v508 = vmul.f32 %v496, %v343
    %v509 = vmul.f32 %v497, %v347
    %v510 = vmul.f32 %v498, %v351
    %v511 = vmul.f32 %v499, %v355
    %v512 = vmul.f32 %v500, %v359
    %v513 = vmul.f32 %v501, %v363
    %v514 = vpack.c.bf16 %v508, %v502
    %v515 = vpack.c.bf16 %v509, %v503
    %v516 = vpack.c.bf16 %v510, %v504
    %v517 = vpack.c.bf16 %v511, %v505
    %v518 = vpack.c.bf16 %v512, %v506
    %v519 = vpack.c.bf16 %v513, %v507
    %520 = vst [vmem:[#allocation3] sm:$0xff] %v514
    %521 = vst [vmem:[#allocation3 + $0x8] sm:$0xff] %v515
    %522 = vst [vmem:[#allocation3 + $0x10] sm:$0xff] %v516
    %523 = vst [vmem:[#allocation3 + $0x18] sm:$0xff] %v517
    %524 = vst [vmem:[#allocation3 + $0x20] sm:$0xff] %v518
    %525 = vst [vmem:[#allocation3 + $0x28] sm:$0xff] %v519
    %v526 = vld [vmem:[#allocation3] sm:$0xff]
    %v527 = vld [vmem:[#allocation3 + $0x8] sm:$0xff]
    %v528 = vld [vmem:[#allocation3 + $0x10] sm:$0xff]
    %v529 = vld [vmem:[#allocation3 + $0x18] sm:$0xff]
    %v530 = vld [vmem:[#allocation3 + $0x20] sm:$0xff]
    %v531 = vld [vmem:[#allocation3 + $0x28] sm:$0xff]
    %v532 = vld [vmem:[#allocation10] sm:$0xf]
    %v533 = vld [vmem:[#allocation10 + $0x4] sm:$0xf]
    %v536 = vunpack.c.l.b16 %v532
    %v537 = vunpack.c.l.b16 %v533
    %v538 = vpack.c.b16 %v537, %v536
    %v540 = vsel %vm182, %v538, 0
    %542 = vmatprep.subr.bf16.mxu0 %v527
    %543 = vmatpush1.bf16.msra.mxu0 %v526
    %544 = vmatprep.subr.bf16.mxu0 0
    %545 = vmatpush1.bf16.msra.mxu0 0
    %546 = vmatprep.subr.bf16.mxu0 0
    %547 = vmatpush1.bf16.msra.mxu0 0
    %548 = vmatprep.subr.bf16.mxu0 0
    %549 = vmatpush1.bf16.msra.mxu0 0
    %550 = vmatprep.subr.bf16.mxu0 0
    %551 = vmatpush1.bf16.msra.mxu0 0
    %552 = vmatprep.subr.bf16.mxu0 0
    %553 = vmatpush1.bf16.msra.mxu0 0
    %554 = vmatprep.subr.bf16.mxu0 0
    %555 = vmatpush1.bf16.msra.mxu0 0
    %556 = vmatprep.subr.bf16.mxu0 0
    %557 = vmatpush1.bf16.msra.mxu0 0
    %558 = vmatprep.subr.bf16.mxu0 0
    %559 = vmatpush1.bf16.msra.mxu0 0
    %560 = vmatprep.subr.bf16.mxu0 0
    %561 = vmatpush1.bf16.msra.mxu0 0
    %562 = vmatprep.subr.bf16.mxu0 0
    %563 = vmatpush1.bf16.msra.mxu0 0
    %564 = vmatprep.subr.bf16.mxu0 0
    %565 = vmatpush1.bf16.msra.mxu0 0
    %566 = vmatprep.subr.bf16.mxu0 0
    %567 = vmatpush1.bf16.msra.mxu0 0
    %568 = vmatprep.subr.bf16.mxu0 0
    %569 = vmatpush1.bf16.msra.mxu0 0
    %570 = vmatprep.subr.bf16.mxu0 0
    %571 = vmatpush1.bf16.msra.mxu0 0
    %572 = vmatprep.subr.bf16.mxu0 0
    %573 = vmatpush1.bf16.msra.mxu0 0
    %574 = vmatprep.mubr.bf16.mxu0 0
    %575 = vmatmul.mubr.bf16.gmra.mrb[0].mxu0 %v540
    %v576 = vpop.f32.mrb[0].mxu0
    %v577 = vadd.f32 0.0, %v576
    %v578 = vpop.f32.mrb[0].mxu0
    %v579 = vadd.f32 0.0, %v578
    %v580 = vpop.f32.mrb[0].mxu0
    %v581 = vadd.f32 0.0, %v580
    %v582 = vpop.f32.mrb[0].mxu0
    %v583 = vadd.f32 0.0, %v582
    %584 = vdwg.mxu0
    %585 = vmatprep.subr.bf16.mxu0 %v529
    %586 = vmatpush1.bf16.msra.mxu0 %v528
    %587 = vmatprep.subr.bf16.mxu0 0
    %588 = vmatpush1.bf16.msra.mxu0 0
    %589 = vmatprep.subr.bf16.mxu0 0
    %590 = vmatpush1.bf16.msra.mxu0 0
    %591 = vmatprep.subr.bf16.mxu0 0
    %592 = vmatpush1.bf16.msra.mxu0 0
    %593 = vmatprep.subr.bf16.mxu0 0
    %594 = vmatpush1.bf16.msra.mxu0 0
    %595 = vmatprep.subr.bf16.mxu0 0
    %596 = vmatpush1.bf16.msra.mxu0 0
    %597 = vmatprep.subr.bf16.mxu0 0
    %598 = vmatpush1.bf16.msra.mxu0 0
    %599 = vmatprep.subr.bf16.mxu0 0
    %600 = vmatpush1.bf16.msra.mxu0 0
    %601 = vmatprep.subr.bf16.mxu0 0
    %602 = vmatpush1.bf16.msra.mxu0 0
    %603 = vmatprep.subr.bf16.mxu0 0
    %604 = vmatpush1.bf16.msra.mxu0 0
    %605 = vmatprep.subr.bf16.mxu0 0
    %606 = vmatpush1.bf16.msra.mxu0 0
    %607 = vmatprep.subr.bf16.mxu0 0
    %608 = vmatpush1.bf16.msra.mxu0 0
    %609 = vmatprep.subr.bf16.mxu0 0
    %610 = vmatpush1.bf16.msra.mxu0 0
    %611 = vmatprep.subr.bf16.mxu0 0
    %612 = vmatpush1.bf16.msra.mxu0 0
    %613 = vmatprep.subr.bf16.mxu0 0
    %614 = vmatpush1.bf16.msra.mxu0 0
    %615 = vmatprep.subr.bf16.mxu0 0
    %616 = vmatpush1.bf16.msra.mxu0 0
    %617 = vmatprep.mubr.bf16.mxu0 0
    %618 = vmatmul.mubr.bf16.gmra.mrb[0].mxu0 %v540
    %v619 = vpop.f32.mrb[0].mxu0
    %v620 = vadd.f32 0.0, %v619
    %v621 = vpop.f32.mrb[0].mxu0
    %v622 = vadd.f32 0.0, %v621
    %v623 = vpop.f32.mrb[0].mxu0
    %v624 = vadd.f32 0.0, %v623
    %v625 = vpop.f32.mrb[0].mxu0
    %v626 = vadd.f32 0.0, %v625
    %627 = vdwg.mxu0
    %628 = vmatprep.subr.bf16.mxu0 %v531
    %629 = vmatpush1.bf16.msra.mxu0 %v530
    %630 = vmatprep.subr.bf16.mxu0 0
    %631 = vmatpush1.bf16.msra.mxu0 0
    %632 = vmatprep.subr.bf16.mxu0 0
    %633 = vmatpush1.bf16.msra.mxu0 0
    %634 = vmatprep.subr.bf16.mxu0 0
    %635 = vmatpush1.bf16.msra.mxu0 0
    %636 = vmatprep.subr.bf16.mxu0 0
    %637 = vmatpush1.bf16.msra.mxu0 0
    %638 = vmatprep.subr.bf16.mxu0 0
    %639 = vmatpush1.bf16.msra.mxu0 0
    %640 = vmatprep.subr.bf16.mxu0 0
    %641 = vmatpush1.bf16.msra.mxu0 0
    %642 = vmatprep.subr.bf16.mxu0 0
    %643 = vmatpush1.bf16.msra.mxu0 0
    %644 = vmatprep.subr.bf16.mxu0 0
    %645 = vmatpush1.bf16.msra.mxu0 0
    %646 = vmatprep.subr.bf16.mxu0 0
    %647 = vmatpush1.bf16.msra.mxu0 0
    %648 = vmatprep.subr.bf16.mxu0 0
    %649 = vmatpush1.bf16.msra.mxu0 0
    %650 = vmatprep.subr.bf16.mxu0 0
    %651 = vmatpush1.bf16.msra.mxu0 0
    %652 = vmatprep.subr.bf16.mxu0 0
    %653 = vmatpush1.bf16.msra.mxu0 0
    %654 = vmatprep.subr.bf16.mxu0 0
    %655 = vmatpush1.bf16.msra.mxu0 0
    %656 = vmatprep.subr.bf16.mxu0 0
    %657 = vmatpush1.bf16.msra.mxu0 0
    %658 = vmatprep.subr.bf16.mxu0 0
    %659 = vmatpush1.bf16.msra.mxu0 0
    %660 = vmatprep.mubr.bf16.mxu0 0
    %661 = vmatmul.mubr.bf16.gmra.mrb[0].mxu0 %v540
    %v662 = vpop.f32.mrb[0].mxu0
    %v663 = vadd.f32 0.0, %v662
    %v664 = vpop.f32.mrb[0].mxu0
    %v665 = vadd.f32 0.0, %v664
    %v666 = vpop.f32.mrb[0].mxu0
    %v667 = vadd.f32 0.0, %v666
    %v668 = vpop.f32.mrb[0].mxu0
    %v669 = vadd.f32 0.0, %v668
    %670 = vdwg.mxu0
    %671 = vst [vmem:[#allocation18] sm:$0xff] %v577
    %672 = vst [vmem:[#allocation18 + $0x8] sm:$0xff] %v579
    %673 = vst [vmem:[#allocation18 + $0x10] sm:$0xff] %v620
    %674 = vst [vmem:[#allocation18 + $0x18] sm:$0xff] %v622
    %675 = vst [vmem:[#allocation18 + $0x20] sm:$0xff] %v663
    %676 = vst [vmem:[#allocation18 + $0x28] sm:$0xff] %v665
    %677 = vst [vmem:[#allocation18 + $0x30] sm:$0xff] %v581
    %678 = vst [vmem:[#allocation18 + $0x38] sm:$0xff] %v583
    %679 = vst [vmem:[#allocation18 + $0x40] sm:$0xff] %v624
    %680 = vst [vmem:[#allocation18 + $0x48] sm:$0xff] %v626
    %681 = vst [vmem:[#allocation18 + $0x50] sm:$0xff] %v667
    %682 = vst [vmem:[#allocation18 + $0x58] sm:$0xff] %v669
    %v683 = vld [vmem:[#allocation7] sm:$0x3f]
    %v684 = vld [vmem:[#allocation18] sm:$0xff]
    %v685 = vld [vmem:[#allocation18 + $0x8] sm:$0xff]
    %v686 = vld [vmem:[#allocation18 + $0x10] sm:$0xff]
    %v687 = vld [vmem:[#allocation18 + $0x18] sm:$0xff]
    %v688 = vld [vmem:[#allocation18 + $0x20] sm:$0xff]
    %v689 = vld [vmem:[#allocation18 + $0x28] sm:$0xff]
    %v690 = vld [vmem:[#allocation18 + $0x30] sm:$0xff]
    %v691 = vld [vmem:[#allocation18 + $0x38] sm:$0xff]
    %v692 = vld [vmem:[#allocation18 + $0x40] sm:$0xff]
    %v693 = vld [vmem:[#allocation18 + $0x48] sm:$0xff]
    %v694 = vld [vmem:[#allocation18 + $0x50] sm:$0xff]
    %v695 = vld [vmem:[#allocation18 + $0x58] sm:$0xff]
    %v697 = vlaneseq
    %v698 = vshrl.u32 %v697, 7
    %v699 = vsub.s32 0, %v698
    %v700 = vrot.slane %v683, %v699
    %v701 = vlaneseq
    %v702 = vshrl.u32 %v701, 7
    %v703 = vsub.s32 1, %v702
    %v704 = vrot.slane %v683, %v703
    %v705 = vlaneseq
    %v706 = vshrl.u32 %v705, 7
    %v707 = vsub.s32 2, %v706
    %v708 = vrot.slane %v683, %v707
    %v709 = vlaneseq
    %v710 = vshrl.u32 %v709, 7
    %v711 = vsub.s32 3, %v710
    %v712 = vrot.slane %v683, %v711
    %v713 = vlaneseq
    %v714 = vshrl.u32 %v713, 7
    %v715 = vsub.s32 4, %v714
    %v716 = vrot.slane %v683, %v715
    %v717 = vlaneseq
    %v718 = vshrl.u32 %v717, 7
    %v719 = vsub.s32 5, %v718
    %v720 = vrot.slane %v683, %v719
    %v727 = vmul.f32 %v684, %v700
    %v728 = vmul.f32 %v685, %v704
    %v729 = vmul.f32 %v686, %v708
    %v730 = vmul.f32 %v687, %v712
    %v731 = vmul.f32 %v688, %v716
    %v732 = vmul.f32 %v689, %v720
    %v733 = vmul.f32 %v690, %v700
    %v734 = vmul.f32 %v691, %v704
    %v735 = vmul.f32 %v692, %v708
    %v736 = vmul.f32 %v693, %v712
    %v737 = vmul.f32 %v694, %v716
    %v738 = vmul.f32 %v695, %v720
    %v739 = vadd.f32 %v727, %v728
    %v740 = vadd.f32 %v739, %v729
    %v741 = vadd.f32 %v740, %v730
    %v742 = vadd.f32 %v741, %v731
    %v743 = vadd.f32 %v742, %v732
    %744 = vadd.xlane.f32.xlu0 %v743
    %v745 = vpop.xlane.xlu0 %744
    %v746 = vadd.f32 %v733, %v734
    %v747 = vadd.f32 %v746, %v735
    %v748 = vadd.f32 %v747, %v736
    %v749 = vadd.f32 %v748, %v737
    %v750 = vadd.f32 %v749, %v738
    %751 = vadd.xlane.f32.xlu0 %v750
    %v752 = vpop.xlane.xlu0 %751
    %v753 = vmul.f32 %v745, 0.001953125
    %v754 = vmul.f32 %v752, 0.001953125
    %v755 = vmul.f32 %v727, %v727
    %v756 = vmul.f32 %v728, %v728
    %v757 = vmul.f32 %v729, %v729
    %v758 = vmul.f32 %v730, %v730
    %v759 = vmul.f32 %v731, %v731
    %v760 = vmul.f32 %v732, %v732
    %v761 = vmul.f32 %v733, %v733
    %v762 = vmul.f32 %v734, %v734
    %v763 = vmul.f32 %v735, %v735
    %v764 = vmul.f32 %v736, %v736
    %v765 = vmul.f32 %v737, %v737
    %v766 = vmul.f32 %v738, %v738
    %v767 = vadd.f32 %v755, %v756
    %v768 = vadd.f32 %v767, %v757
    %v769 = vadd.f32 %v768, %v758
    %v770 = vadd.f32 %v769, %v759
    %v771 = vadd.f32 %v770, %v760
    %772 = vadd.xlane.f32.xlu0 %v771
    %v773 = vpop.xlane.xlu0 %772
    %v774 = vadd.f32 %v761, %v762
    %v775 = vadd.f32 %v774, %v763
    %v776 = vadd.f32 %v775, %v764
    %v777 = vadd.f32 %v776, %v765
    %v778 = vadd.f32 %v777, %v766
    %779 = vadd.xlane.f32.xlu0 %v778
    %v780 = vpop.xlane.xlu0 %779
    %v781 = vmul.f32 %v773, 0.001953125
    %v782 = vmul.f32 %v780, 0.001953125
    %v783 = vmul.f32 %v753, %v753
    %v784 = vmul.f32 %v754, %v754
    %v785 = vsub.f32 %v781, %v783
    %v786 = vsub.f32 %v782, %v784
    %v787 = vmax.f32 %v785, 0.0
    %v788 = vmax.f32 %v786, 0.0
    %v789 = vld [vmem:[#allocation15] sm:$0xff]
    %v790 = vld [vmem:[#allocation15 + $0x8] sm:$0xff]
    %v791 = vadd.f32 %v787, 1e-05
    %v792 = vadd.f32 %v788, 1e-05
    %v793 = vrsqrt.pop %v791
    %v794 = vrsqrt.pop %v792
    %v795 = vmul.f32 %v789, %v793
    %v796 = vmul.f32 %v790, %v794
    %v797 = vld [vmem:[#allocation16] sm:$0xff]
    %v798 = vld [vmem:[#allocation16 + $0x8] sm:$0xff]
    %v799 = vmul.f32 %v753, %v795
    %v800 = vmul.f32 %v754, %v796
    %v801 = vsub.f32 %v797, %v799
    %v802 = vsub.f32 %v798, %v800
    %804 = vset.pattern.permute.xlu0 0
    %805 = vperm.xlu0 %804, %v795
    %v806 = vpop.permute.xlu0 %805
    %809 = vset.pattern.permute.xlu0 0
    %810 = vperm.xlu0 %809, %v796
    %v811 = vpop.permute.xlu0 %810
    %v813 = vmul.f32 %v684, %v806
    %v814 = vmul.f32 %v685, %v806
    %v815 = vmul.f32 %v686, %v806
    %v816 = vmul.f32 %v687, %v806
    %v817 = vmul.f32 %v688, %v806
    %v818 = vmul.f32 %v689, %v806
    %v819 = vmul.f32 %v690, %v811
    %v820 = vmul.f32 %v691, %v811
    %v821 = vmul.f32 %v692, %v811
    %v822 = vmul.f32 %v693, %v811
    %v823 = vmul.f32 %v694, %v811
    %v824 = vmul.f32 %v695, %v811
    %826 = vset.pattern.permute.xlu0 0
    %827 = vperm.xlu0 %826, %v801
    %v828 = vpop.permute.xlu0 %827
    %831 = vset.pattern.permute.xlu0 0
    %832 = vperm.xlu0 %831, %v802
    %v833 = vpop.permute.xlu0 %832
    %v835 = vadd.f32 %v813, %v828
    %v836 = vadd.f32 %v814, %v828
    %v837 = vadd.f32 %v815, %v828
    %v838 = vadd.f32 %v816, %v828
    %v839 = vadd.f32 %v817, %v828
    %v840 = vadd.f32 %v818, %v828
    %v841 = vadd.f32 %v819, %v833
    %v842 = vadd.f32 %v820, %v833
    %v843 = vadd.f32 %v821, %v833
    %v844 = vadd.f32 %v822, %v833
    %v845 = vadd.f32 %v823, %v833
    %v846 = vadd.f32 %v824, %v833
    %v847 = vmax.f32 %v835, 0.0
    %v848 = vmax.f32 %v836, 0.0
    %v849 = vmax.f32 %v837, 0.0
    %v850 = vmax.f32 %v838, 0.0
    %v851 = vmax.f32 %v839, 0.0
    %v852 = vmax.f32 %v840, 0.0
    %v853 = vmax.f32 %v841, 0.0
    %v854 = vmax.f32 %v842, 0.0
    %v855 = vmax.f32 %v843, 0.0
    %v856 = vmax.f32 %v844, 0.0
    %v857 = vmax.f32 %v845, 0.0
    %v858 = vmax.f32 %v846, 0.0
    %859 = vst [vmem:[#allocation18] sm:$0xff] %v847
    %860 = vst [vmem:[#allocation18 + $0x8] sm:$0xff] %v848
    %861 = vst [vmem:[#allocation18 + $0x10] sm:$0xff] %v849
    %862 = vst [vmem:[#allocation18 + $0x18] sm:$0xff] %v850
    %863 = vst [vmem:[#allocation18 + $0x20] sm:$0xff] %v851
    %864 = vst [vmem:[#allocation18 + $0x28] sm:$0xff] %v852
    %865 = vst [vmem:[#allocation18 + $0x30] sm:$0xff] %v853
    %866 = vst [vmem:[#allocation18 + $0x38] sm:$0xff] %v854
    %867 = vst [vmem:[#allocation18 + $0x40] sm:$0xff] %v855
    %868 = vst [vmem:[#allocation18 + $0x48] sm:$0xff] %v856
    %869 = vst [vmem:[#allocation18 + $0x50] sm:$0xff] %v857
    %870 = vst [vmem:[#allocation18 + $0x58] sm:$0xff] %v858
    // Predicated region
    $region66: #{tpu_custom_call.1} parent=1 // pred_check
      _
    $region67: #{tpu_custom_call.1} parent=1 // pred_check_branch
      %872 = sbr.rel (0) target = $region69
    $region68: #{tpu_custom_call.1} parent=1 // pred_region
      %s874 = ssub.s32 1536, 1536
      %875 = vsyncadd [#allocation6], %s874
      %s876 = sshll.u32 [#allocation18], 4
      %s877 = int_to_ptr.vmem [resolvable:$true] %s876
      %882 = dma.vmem_to_hbm [thread:$0]  %s877, 1536, %s8, [#allocation6], 768, 768, 48
    $region69: #{tpu_custom_call.1} parent=1 // pred_fallthru
      _
    // Predicated region
    $region70: #{tpu_custom_call.1} parent=1 // pred_check
      _
    $region71: #{tpu_custom_call.1} parent=1 // pred_check_branch
      %884 = sbr.rel (0) target = $region73
    $region72: #{tpu_custom_call.1} parent=1 // pred_region
      %885 = dma.done [#allocation6], 1536
    $region73: #{tpu_custom_call.1} parent=1 // pred_fallthru
      _
    %886 = vsyncpa [#allocation5], 1
    %887 = vsyncpa [#allocation8], 1
    %888 = vsyncpa [#allocation11], 1
    %889 = vsyncpa [#allocation14], 1
    %890 = vsyncpa [#allocation17], 1
    %891 = vsyncpa [#allocation6], 1

</llo_original>
